<compile_context>
chip_gen: v7x
topology: tpu7x:2x2x1
jax: 0.10.0
libtpu: 0.0.40
codegen_flags: <defaults>
</compile_context>

<pallas_src>
import jax
import jax.numpy as jnp
from jax.experimental import pallas as pl
from jax.experimental.pallas import tpu as pltpu


def critic_kernel(x_ref, w1_ref, b1_ref, w2_ref, b2_ref, w3_ref, b3_ref, o_ref):
    # fc1: (64, in_dim) @ (in_dim, tb) -> (64, tb); f32 accumulate, bias broadcast over lanes.
    h1 = jnp.dot(w1_ref[...], x_ref[...], preferred_element_type=jnp.float32)
    h1 = jnp.maximum(h1 + b1_ref[...], 0.0)
    # fc2: (128, 64) @ (64, tb) -> (128, tb); MXU fed in compute dtype, epilogue stays f32
    # so the same kernel is valid on v5e (no bf16 VPU).
    h2 = jnp.dot(w2_ref[...], h1.astype(w2_ref.dtype),
                 preferred_element_type=jnp.float32)
    h2 = jnp.maximum(h2 + b2_ref[...], 0.0)
    # fc3: (1, 128) @ (128, tb) -> lane-dense (1, tb) row; scalar bias read from SMEM.
    q = jnp.dot(w3_ref[...], h2.astype(w3_ref.dtype),
                preferred_element_type=jnp.float32)
    o_ref[...] = (q + b3_ref[0, 0]).astype(o_ref.dtype)


def _pick_batch_tile(B, block_batch):
    """Lane-aligned batch tile. For mid-size batches force >= 2 tiles (v7x has 2 TCs)."""
    if B <= 256:
        return B  # single block equal to the full dim (legal even if not a multiple of 128)
    if B <= block_batch:
        return min(block_batch, ((pl.cdiv(B, 2) + 127) // 128) * 128)
    return block_batch


def critic_forward(state, action, params, *, block_batch=1024,
                   compute_dtype=jnp.bfloat16, min_pallas_batch=128):
    """state: (B, state_dim), action: (B, action_dim) -> q_value: (B, 1) float32."""
    w1, b1, w2, b2, w3, b3 = params
    B, state_dim = state.shape
    action_dim = action.shape[1]
    in_dim = state_dim + action_dim
    h1_dim = w1.shape[1]
    h2_dim = w2.shape[1]
    assert block_batch % 128 == 0 and block_batch >= 256

    # Tiny batches: pallas_call launch overhead dominates -> plain XLA path.
    if B < min_pallas_batch:
        return ref_forward(state, action, params)

    # Feature-major operands: batch lives on the lane axis (lane-dense in & out).
    x_t = jnp.concatenate([state, action], axis=1).T.astype(compute_dtype)   # (in_dim, B)
    w1_t = w1.T.astype(compute_dtype)                                        # (64, in_dim)
    w2_t = w2.T.astype(compute_dtype)                                        # (128, 64)
    w3_t = jnp.reshape(w3, (1, h2_dim)).astype(compute_dtype)                # (1, 128)
    b1_c = jnp.reshape(b1, (h1_dim, 1)).astype(jnp.float32)                  # column, bcast lanes
    b2_c = jnp.reshape(b2, (h2_dim, 1)).astype(jnp.float32)
    b3_c = jnp.reshape(b3, (1, 1)).astype(jnp.float32)                       # SMEM scalar

    tb = _pick_batch_tile(B, block_batch)
    grid = (pl.cdiv(B, tb),)

    def resident(shape):  # constant index_map -> DMA'd once, stays VMEM-resident
        return pl.BlockSpec(shape, lambda i: (0, 0))

    out = pl.pallas_call(
        critic_kernel,
        out_shape=jax.ShapeDtypeStruct((1, B), jnp.float32),
        grid_spec=pltpu.PrefetchScalarGridSpec(
            num_scalar_prefetch=0,
            grid=grid,
            in_specs=[
                pl.BlockSpec((in_dim, tb), lambda i: (0, i)),        # x.T batch tile
                resident((h1_dim, in_dim)),                          # w1.T
                resident((h1_dim, 1)),                               # b1 column
                resident((h2_dim, h1_dim)),                          # w2.T
                resident((h2_dim, 1)),                               # b2 column
                resident((1, h2_dim)),                               # w3 row
                pl.BlockSpec(memory_space=pltpu.MemorySpace.SMEM),   # b3 scalar
            ],
            out_specs=pl.BlockSpec((1, tb), lambda i: (0, i)),       # lane-dense output row
        ),
        compiler_params=pltpu.CompilerParams(
            dimension_semantics=("parallel",),   # batch tiles shard across v7x's 2 TCs
        ),
    )(x_t, w1_t, b1_c, w2_t, b2_c, w3_t, b3_c)
    return out.reshape(B, 1)


def init_critic_params(key, state_dim, action_dim):
    """Deterministic init mimicking PyTorch nn.Linear default (uniform +/- 1/sqrt(fan_in)).
    Weights stored (in_features, out_features) so the reference computes x @ W + b."""
    dims = [(state_dim + action_dim, 64), (64, 128), (128, 1)]
    params = []
    for (fan_in, fan_out) in dims:
        key, kw, kb = jax.random.split(key, 3)
        bound = 1.0 / jnp.sqrt(fan_in)
        w = jax.random.uniform(kw, (fan_in, fan_out), jnp.float32, -bound, bound)
        b = jax.random.uniform(kb, (1, fan_out), jnp.float32, -bound, bound)
        params += [w, b]
    return tuple(params)


def ref_forward(state, action, params):
    w1, b1, w2, b2, w3, b3 = params
    x = jnp.concatenate([state, action], axis=1)
    h1 = jnp.maximum(x @ w1 + b1, 0.0)
    h2 = jnp.maximum(h1 @ w2 + b2, 0.0)
    return h2 @ w3 + b3


if __name__ == "__main__":
    state_dim, action_dim = 8, 4

    key = jax.random.PRNGKey(0)
    k_p, k_s1, k_a1, k_s2, k_a2 = jax.random.split(key, 5)
    params = init_critic_params(k_p, state_dim, action_dim)

    # 1) tiny batch matching the module demo sizes; force the kernel path, f32 operands
    B1 = 4
    s1 = jax.random.normal(k_s1, (B1, state_dim), jnp.float32)
    a1 = jax.random.normal(k_a1, (B1, action_dim), jnp.float32)
    q1 = critic_forward(s1, a1, params, compute_dtype=jnp.float32, min_pallas_batch=0)
    jax.block_until_ready(q1)
    assert q1.shape == (B1, 1)
    assert jnp.allclose(q1, ref_forward(s1, a1, params), atol=1e-5, rtol=1e-5)

    # 2) replay-sized batch: two lane-aligned tiles (256 + masked boundary), f32 operands
    B2 = 384
    s2 = jax.random.normal(k_s2, (B2, state_dim), jnp.float32)
    a2 = jax.random.normal(k_a2, (B2, action_dim), jnp.float32)
    q2 = critic_forward(s2, a2, params, compute_dtype=jnp.float32)
    jax.block_until_ready(q2)
    assert q2.shape == (B2, 1)
    assert jnp.allclose(q2, ref_forward(s2, a2, params), atol=1e-4, rtol=1e-4)

    # 3) default bf16 MXU path (f32 accumulation / epilogue); looser tolerance since the
    #    inputs themselves are cast to bf16 before fc1 (documented precision trade-off).
    q3 = critic_forward(s2, a2, params)
    jax.block_until_ready(q3)
    assert jnp.allclose(q3, ref_forward(s2, a2, params), atol=5e-2, rtol=5e-2)

    # 4) tiny batch auto-dispatch: plain jnp path (no pallas launch overhead)
    q4 = critic_forward(s1, a1, params)
    jax.block_until_ready(q4)
    assert jnp.allclose(q4, ref_forward(s1, a1, params), atol=1e-5, rtol=1e-5)

    print("KERNEL_OK")
</pallas_src>

<mosaic_0001>
module attributes {stable_mosaic.version = 11 : i64} {
  func.func @critic_kernel(%arg0: i32, %arg1: memref<12x4xf32, #tpu.memory_space<vmem>>, %arg2: memref<64x12xf32, #tpu.memory_space<vmem>>, %arg3: memref<64x1xf32, #tpu.memory_space<vmem>>, %arg4: memref<128x64xf32, #tpu.memory_space<vmem>>, %arg5: memref<128x1xf32, #tpu.memory_space<vmem>>, %arg6: memref<1x128xf32, #tpu.memory_space<vmem>>, %arg7: memref<1x1xf32, #tpu.memory_space<smem>>, %arg8: memref<1x4xf32, #tpu.memory_space<vmem>>) attributes {dimension_semantics = [#tpu.dimension_semantics<parallel>], iteration_bounds = array<i64: 1>, scalar_prefetch = 0 : i64, scratch_operands = 0 : i64, tpu.core_type = #tpu.core_type<tc>, window_params = [{transform_indices = @transform_0, window_bounds = array<i64: 12, 4>}, {pipeline_mode = #tpu.pipeline_mode<synchronous>, transform_indices = @transform_1, window_bounds = array<i64: 64, 12>}, {pipeline_mode = #tpu.pipeline_mode<synchronous>, transform_indices = @transform_2, window_bounds = array<i64: 64, 1>}, {pipeline_mode = #tpu.pipeline_mode<synchronous>, transform_indices = @transform_3, window_bounds = array<i64: 128, 64>}, {pipeline_mode = #tpu.pipeline_mode<synchronous>, transform_indices = @transform_4, window_bounds = array<i64: 128, 1>}, {pipeline_mode = #tpu.pipeline_mode<synchronous>, transform_indices = @transform_5, window_bounds = array<i64: 1, 128>}, {transform_indices = @transform_6, window_bounds = array<i64: 1, 1>}, {transform_indices = @transform_7, window_bounds = array<i64: 1, 4>}]} {
    %c0 = arith.constant 0 : index
    %c0_0 = arith.constant 0 : index
    %0 = vector.load %arg2[%c0, %c0_0] : memref<64x12xf32, #tpu.memory_space<vmem>>, vector<64x12xf32>
    %c0_1 = arith.constant 0 : index
    %c0_2 = arith.constant 0 : index
    %1 = vector.load %arg1[%c0_1, %c0_2] : memref<12x4xf32, #tpu.memory_space<vmem>>, vector<12x4xf32>
    %cst = arith.constant dense<0.000000e+00> : vector<64x4xf32>
    %2 = tpu.matmul %0, %1, %cst {dimension_numbers = #tpu.dot_dimension_numbers<[1], [0], [0], [1], [0, 0, 1, 1], [], []>} : vector<64x12xf32>, vector<12x4xf32>, vector<64x4xf32> -> vector<64x4xf32>
    %c0_3 = arith.constant 0 : index
    %c0_4 = arith.constant 0 : index
    %3 = vector.load %arg3[%c0_3, %c0_4] : memref<64x1xf32, #tpu.memory_space<vmem>>, vector<64x1xf32>
    %4 = vector.broadcast %3 : vector<64x1xf32> to vector<64x4xf32>
    %5 = arith.addf %2, %4 : vector<64x4xf32>
    %cst_5 = arith.constant 0.000000e+00 : f32
    %6 = vector.broadcast %cst_5 : f32 to vector<64x4xf32>
    %7 = arith.maximumf %5, %6 : vector<64x4xf32>
    %c0_6 = arith.constant 0 : index
    %c0_7 = arith.constant 0 : index
    %8 = vector.load %arg4[%c0_6, %c0_7] : memref<128x64xf32, #tpu.memory_space<vmem>>, vector<128x64xf32>
    %cst_8 = arith.constant dense<0.000000e+00> : vector<128x4xf32>
    %9 = tpu.matmul %8, %7, %cst_8 {dimension_numbers = #tpu.dot_dimension_numbers<[1], [0], [0], [1], [0, 0, 1, 1], [], []>} : vector<128x64xf32>, vector<64x4xf32>, vector<128x4xf32> -> vector<128x4xf32>
    %c0_9 = arith.constant 0 : index
    %c0_10 = arith.constant 0 : index
    %10 = vector.load %arg5[%c0_9, %c0_10] : memref<128x1xf32, #tpu.memory_space<vmem>>, vector<128x1xf32>
    %11 = vector.broadcast %10 : vector<128x1xf32> to vector<128x4xf32>
    %12 = arith.addf %9, %11 : vector<128x4xf32>
    %cst_11 = arith.constant 0.000000e+00 : f32
    %13 = vector.broadcast %cst_11 : f32 to vector<128x4xf32>
    %14 = arith.maximumf %12, %13 : vector<128x4xf32>
    %c0_12 = arith.constant 0 : index
    %c0_13 = arith.constant 0 : index
    %15 = vector.load %arg6[%c0_12, %c0_13] : memref<1x128xf32, #tpu.memory_space<vmem>>, vector<1x128xf32>
    %cst_14 = arith.constant dense<0.000000e+00> : vector<1x4xf32>
    %16 = tpu.matmul %15, %14, %cst_14 {dimension_numbers = #tpu.dot_dimension_numbers<[1], [0], [0], [1], [0, 0, 1, 1], [], []>} : vector<1x128xf32>, vector<128x4xf32>, vector<1x4xf32> -> vector<1x4xf32>
    %c0_15 = arith.constant 0 : index
    %c0_16 = arith.constant 0 : index
    %17 = memref.load %arg7[%c0_15, %c0_16] : memref<1x1xf32, #tpu.memory_space<smem>>
    %18 = vector.broadcast %17 : f32 to vector<1x4xf32>
    %19 = arith.addf %16, %18 : vector<1x4xf32>
    %c0_17 = arith.constant 0 : index
    %c0_18 = arith.constant 0 : index
    %20 = vector.load %arg8[%c0_17, %c0_18] : memref<1x4xf32, #tpu.memory_space<vmem>>, vector<1x4xf32>
    tpu.vector_store %arg8[%c0_17, %c0_18], %19 {strides = array<i32>} : memref<1x4xf32, #tpu.memory_space<vmem>>, vector<1x4xf32>,
    return
  }
  func.func @transform_0(%arg0: i32) -> (i32, i32) {
    %c0_i32 = arith.constant 0 : i32
    %c0_i32_0 = arith.constant 0 : i32
    return %c0_i32, %arg0 : i32, i32
  }
  func.func @transform_1(%arg0: i32) -> (i32, i32) {
    %c0_i32 = arith.constant 0 : i32
    %c0_i32_0 = arith.constant 0 : i32
    %c0_i32_1 = arith.constant 0 : i32
    return %c0_i32, %c0_i32_0 : i32, i32
  }
  func.func @transform_2(%arg0: i32) -> (i32, i32) {
    %c0_i32 = arith.constant 0 : i32
    %c0_i32_0 = arith.constant 0 : i32
    %c0_i32_1 = arith.constant 0 : i32
    return %c0_i32, %c0_i32_0 : i32, i32
  }
  func.func @transform_3(%arg0: i32) -> (i32, i32) {
    %c0_i32 = arith.constant 0 : i32
    %c0_i32_0 = arith.constant 0 : i32
    %c0_i32_1 = arith.constant 0 : i32
    return %c0_i32, %c0_i32_0 : i32, i32
  }
  func.func @transform_4(%arg0: i32) -> (i32, i32) {
    %c0_i32 = arith.constant 0 : i32
    %c0_i32_0 = arith.constant 0 : i32
    %c0_i32_1 = arith.constant 0 : i32
    return %c0_i32, %c0_i32_0 : i32, i32
  }
  func.func @transform_5(%arg0: i32) -> (i32, i32) {
    %c0_i32 = arith.constant 0 : i32
    %c0_i32_0 = arith.constant 0 : i32
    %c0_i32_1 = arith.constant 0 : i32
    return %c0_i32, %c0_i32_0 : i32, i32
  }
  func.func @transform_6(%arg0: i32) -> (i32, i32) {
    %c0_i32 = arith.constant 0 : i32
    %c0_i32_0 = arith.constant 0 : i32
    %c0_i32_1 = arith.constant 0 : i32
    return %c0_i32, %c0_i32_0 : i32, i32
  }
  func.func @transform_7(%arg0: i32) -> (i32, i32) {
    %c0_i32 = arith.constant 0 : i32
    %c0_i32_0 = arith.constant 0 : i32
    return %c0_i32, %arg0 : i32, i32
  }
}

</mosaic_0001>

<llo_original>
// kernel: tpu_custom_call.1
$region0: #{tpu_custom_call.1}
  #allocation0 [shape = 'u32[]', space=smem, size = 0x4, offset = 0x4, fixed_abs, tag = 'smem constant byte address 0x4 - core index']
  #allocation1 [shape = 'u32[144,128]{1,0:T(1,128)}', space=vmem, size = 0x12000, scoped, tag = 'internal scratch']
  #allocation2 [shape = 'f32[1,1]{1,0:T(1,128)S(6)}', space=smem, size = 0x200, scoped, tag = 'scoped memory for tpu_custom_call.1']
  %s0 = inlined_call_operand.vmem [shape: f32[12,4], index: 0, kind: input, shape index: {}]
  %s1 = inlined_call_operand.vmem [shape: f32[64,12], index: 1, kind: input, shape index: {}]
  %s2 = inlined_call_operand.vmem [shape: f32[64,1], index: 2, kind: input, shape index: {}]
  %s3 = inlined_call_operand.vmem [shape: f32[128,64], index: 3, kind: input, shape index: {}]
  %s4 = inlined_call_operand.vmem [shape: f32[128,1], index: 4, kind: input, shape index: {}]
  %s5 = inlined_call_operand.vmem [shape: f32[1,128], index: 5, kind: input, shape index: {}]
  %s6 = inlined_call_operand.<no memory space> [shape: f32[1,1], index: 6, kind: input, shape index: {}]
  %s7 = inlined_call_operand.hbm [shape: f32[1,4], index: 7, kind: output, shape index: {}]
  %s8 = sld [smem:[#allocation0]]
  $region38: #{tpu_custom_call.1} parent=0
    _
  %s10 = ssub.s32 1, %s8
  %s11 = scalar_select 0, %s10, %s8
  %12 = sst [smem:[#allocation2]] %s6
  $region1: #{tpu_custom_call.1} parent=0
    #allocation3 [shape = 'u8[512]{0}', space=vmem, size = 0x400, scoped, tag = 'output window, operand 0, single buffered']
    #allocation4 [shape = 's32[1]{0}', space=sflag, size = 0x4, scoped, tag = 'scoped memory for tpu_custom_call.1']
    %13 = vsyncpa [#allocation4], 0
    // Predicated region
    $region2: #{tpu_custom_call.1} parent=1 // pred_check
      _
    $region3: #{tpu_custom_call.1} parent=1 // pred_check_branch
      %15 = sbr.rel (0) target = $region5
    $region4: #{tpu_custom_call.1} parent=1 // pred_region
      _
    $region5: #{tpu_custom_call.1} parent=1 // pred_fallthru
      _
    // Predicated region
    $region6: #{tpu_custom_call.1} parent=1 // pred_check
      _
    $region7: #{tpu_custom_call.1} parent=1 // pred_check_branch
      %17 = sbr.rel (0) target = $region9
    $region8: #{tpu_custom_call.1} parent=1 // pred_region
      _
    $region9: #{tpu_custom_call.1} parent=1 // pred_fallthru
      _
    // Predicated region
    $region10: #{tpu_custom_call.1} parent=1 // pred_check
      _
    $region11: #{tpu_custom_call.1} parent=1 // pred_check_branch
      %19 = sbr.rel (0) target = $region13
    $region12: #{tpu_custom_call.1} parent=1 // pred_region
      _
    $region13: #{tpu_custom_call.1} parent=1 // pred_fallthru
      _
    // Predicated region
    $region14: #{tpu_custom_call.1} parent=1 // pred_check
      _
    $region15: #{tpu_custom_call.1} parent=1 // pred_check_branch
      %21 = sbr.rel (0) target = $region17
    $region16: #{tpu_custom_call.1} parent=1 // pred_region
      _
    $region17: #{tpu_custom_call.1} parent=1 // pred_fallthru
      _
    // Predicated region
    $region18: #{tpu_custom_call.1} parent=1 // pred_check
      _
    $region19: #{tpu_custom_call.1} parent=1 // pred_check_branch
      %23 = sbr.rel (0) target = $region21
    $region20: #{tpu_custom_call.1} parent=1 // pred_region
      _
    $region21: #{tpu_custom_call.1} parent=1 // pred_fallthru
      _
    // Predicated region
    $region22: #{tpu_custom_call.1} parent=1 // pred_check
      _
    $region23: #{tpu_custom_call.1} parent=1 // pred_check_branch
      %25 = sbr.rel (0) target = $region25
    $region24: #{tpu_custom_call.1} parent=1 // pred_region
      _
    $region25: #{tpu_custom_call.1} parent=1 // pred_fallthru
      _
    // Predicated region
    $region26: #{tpu_custom_call.1} parent=1 // pred_check
      _
    $region27: #{tpu_custom_call.1} parent=1 // pred_check_branch
      %27 = sbr.rel (0) target = $region29
    $region28: #{tpu_custom_call.1} parent=1 // pred_region
      _
    $region29: #{tpu_custom_call.1} parent=1 // pred_fallthru
      _
    %v28 = vld [vmem:[%s1] sm:$0xff]
    %v29 = vld [vmem:[%s1 + $0x8] sm:$0xff]
    %v30 = vld [vmem:[%s1 + $0x10] sm:$0xff]
    %v31 = vld [vmem:[%s1 + $0x18] sm:$0xff]
    %v32 = vld [vmem:[%s1 + $0x20] sm:$0xff]
    %v33 = vld [vmem:[%s1 + $0x28] sm:$0xff]
    %v34 = vld [vmem:[%s1 + $0x30] sm:$0xff]
    %v35 = vld [vmem:[%s1 + $0x38] sm:$0xff]
    %v36 = vld [vmem:[%s0] sm:$0xff]
    %v37 = vld [vmem:[%s0 + $0x8] sm:$0xf]
    %v38 = vld [vmem:[%s2] sm:$0xff]
    %v39 = vld [vmem:[%s2 + $0x8] sm:$0xff]
    %v40 = vld [vmem:[%s2 + $0x10] sm:$0xff]
    %v41 = vld [vmem:[%s2 + $0x18] sm:$0xff]
    %v42 = vld [vmem:[%s2 + $0x20] sm:$0xff]
    %v43 = vld [vmem:[%s2 + $0x28] sm:$0xff]
    %v44 = vld [vmem:[%s2 + $0x30] sm:$0xff]
    %v45 = vld [vmem:[%s2 + $0x38] sm:$0xff]
    %47 = vset.pattern.permute.xlu0 0
    %48 = vperm.xlu0 %47, %v38
    %v49 = vpop.permute.xlu0 %48
    %52 = vset.pattern.permute.xlu0 0
    %53 = vperm.xlu0 %52, %v39
    %v54 = vpop.permute.xlu0 %53
    %57 = vset.pattern.permute.xlu0 0
    %58 = vperm.xlu0 %57, %v40
    %v59 = vpop.permute.xlu0 %58
    %62 = vset.pattern.permute.xlu0 0
    %63 = vperm.xlu0 %62, %v41
    %v64 = vpop.permute.xlu0 %63
    %67 = vset.pattern.permute.xlu0 0
    %68 = vperm.xlu0 %67, %v42
    %v69 = vpop.permute.xlu0 %68
    %72 = vset.pattern.permute.xlu0 0
    %73 = vperm.xlu0 %72, %v43
    %v74 = vpop.permute.xlu0 %73
    %77 = vset.pattern.permute.xlu0 0
    %78 = vperm.xlu0 %77, %v44
    %v79 = vpop.permute.xlu0 %78
    %82 = vset.pattern.permute.xlu0 0
    %83 = vperm.xlu0 %82, %v45
    %v84 = vpop.permute.xlu0 %83
    %vm86 = vcmask 97280
    %v88 = vsel %vm86, %v28, 0
    %v91 = vsel %vm86, %v29, 0
    %v94 = vsel %vm86, %v30, 0
    %v97 = vsel %vm86, %v31, 0
    %v100 = vsel %vm86, %v32, 0
    %v103 = vsel %vm86, %v33, 0
    %v106 = vsel %vm86, %v34, 0
    %v109 = vsel %vm86, %v35, 0
    %vm111 = vcmask 1043456
    %v113 = vsel %vm111, %v37, 0
    %115 = vmatprep.subr.mxu0 0.0
    %116 = vmatpush1.msra.mxu0 %v36
    %117 = vmatprep.subr.mxu0 0.0
    %118 = vmatpush1.msra.mxu0 %v113
    %119 = vmatprep.subr.mxu0 0.0
    %120 = vmatpush1.msra.mxu0 0.0
    %121 = vmatprep.subr.mxu0 0.0
    %122 = vmatpush1.msra.mxu0 0.0
    %123 = vmatprep.subr.mxu0 0.0
    %124 = vmatpush1.msra.mxu0 0.0
    %125 = vmatprep.subr.mxu0 0.0
    %126 = vmatpush1.msra.mxu0 0.0
    %127 = vmatprep.subr.mxu0 0.0
    %128 = vmatpush1.msra.mxu0 0.0
    %129 = vmatprep.subr.mxu0 0.0
    %130 = vmatpush1.msra.mxu0 0.0
    %131 = vmatprep.subr.mxu0 0.0
    %132 = vmatpush1.msra.mxu0 0.0
    %133 = vmatprep.subr.mxu0 0.0
    %134 = vmatpush1.msra.mxu0 0.0
    %135 = vmatprep.subr.mxu0 0.0
    %136 = vmatpush1.msra.mxu0 0.0
    %137 = vmatprep.subr.mxu0 0.0
    %138 = vmatpush1.msra.mxu0 0.0
    %139 = vmatprep.subr.mxu0 0.0
    %140 = vmatpush1.msra.mxu0 0.0
    %141 = vmatprep.subr.mxu0 0.0
    %142 = vmatpush1.msra.mxu0 0.0
    %143 = vmatprep.subr.mxu0 0.0
    %144 = vmatpush1.msra.mxu0 0.0
    %145 = vmatprep.subr.mxu0 0.0
    %146 = vmatpush1.msra.mxu0 0.0
    %147 = vmatprep.subr.mxu0 0.0
    %148 = vmatpush1.msra.mxu0 0.0
    %149 = vmatprep.subr.mxu0 0.0
    %150 = vmatpush1.msra.mxu0 0.0
    %151 = vmatprep.subr.mxu0 0.0
    %152 = vmatpush1.msra.mxu0 0.0
    %153 = vmatprep.subr.mxu0 0.0
    %154 = vmatpush1.msra.mxu0 0.0
    %155 = vmatprep.subr.mxu0 0.0
    %156 = vmatpush1.msra.mxu0 0.0
    %157 = vmatprep.subr.mxu0 0.0
    %158 = vmatpush1.msra.mxu0 0.0
    %159 = vmatprep.subr.mxu0 0.0
    %160 = vmatpush1.msra.mxu0 0.0
    %161 = vmatprep.subr.mxu0 0.0
    %162 = vmatpush1.msra.mxu0 0.0
    %163 = vmatprep.subr.mxu0 0.0
    %164 = vmatpush1.msra.mxu0 0.0
    %165 = vmatprep.subr.mxu0 0.0
    %166 = vmatpush1.msra.mxu0 0.0
    %167 = vmatprep.subr.mxu0 0.0
    %168 = vmatpush1.msra.mxu0 0.0
    %169 = vmatprep.subr.mxu0 0.0
    %170 = vmatpush1.msra.mxu0 0.0
    %171 = vmatprep.subr.mxu0 0.0
    %172 = vmatpush1.msra.mxu0 0.0
    %173 = vmatprep.subr.mxu0 0.0
    %174 = vmatpush1.msra.mxu0 0.0
    %175 = vmatprep.subr.mxu0 0.0
    %176 = vmatpush1.msra.mxu0 0.0
    %177 = vmatprep.subr.mxu0 0.0
    %178 = vmatpush1.msra.mxu0 0.0
    %179 = vmatprep.mubr.f32.mxu0 0.0
    %180 = vmatmul.mubr.f32.gmra.mrb[0].mxu0 %v88
    %v181 = vpop.f32.mrb[0].mxu0
    %v182 = vadd.f32 %v49, %v181
    %v183 = vpop.f32.mrb[0].mxu0
    %184 = vmatprep.mubr.f32.mxu0 0.0
    %185 = vmatmul.mubr.f32.gmra.mrb[0].mxu0 %v91
    %v186 = vpop.f32.mrb[0].mxu0
    %v187 = vadd.f32 %v54, %v186
    %v188 = vpop.f32.mrb[0].mxu0
    %189 = vmatprep.mubr.f32.mxu0 0.0
    %190 = vmatmul.mubr.f32.gmra.mrb[0].mxu0 %v94
    %v191 = vpop.f32.mrb[0].mxu0
    %v192 = vadd.f32 %v59, %v191
    %v193 = vpop.f32.mrb[0].mxu0
    %194 = vmatprep.mubr.f32.mxu0 0.0
    %195 = vmatmul.mubr.f32.gmra.mrb[0].mxu0 %v97
    %v196 = vpop.f32.mrb[0].mxu0
    %v197 = vadd.f32 %v64, %v196
    %v198 = vpop.f32.mrb[0].mxu0
    %199 = vmatprep.mubr.f32.mxu0 0.0
    %200 = vmatmul.mubr.f32.gmra.mrb[0].mxu0 %v100
    %v201 = vpop.f32.mrb[0].mxu0
    %v202 = vadd.f32 %v69, %v201
    %v203 = vpop.f32.mrb[0].mxu0
    %204 = vmatprep.mubr.f32.mxu0 0.0
    %205 = vmatmul.mubr.f32.gmra.mrb[0].mxu0 %v103
    %v206 = vpop.f32.mrb[0].mxu0
    %v207 = vadd.f32 %v74, %v206
    %v208 = vpop.f32.mrb[0].mxu0
    %209 = vmatprep.mubr.f32.mxu0 0.0
    %210 = vmatmul.mubr.f32.gmra.mrb[0].mxu0 %v106
    %v211 = vpop.f32.mrb[0].mxu0
    %v212 = vadd.f32 %v79, %v211
    %v213 = vpop.f32.mrb[0].mxu0
    %214 = vmatprep.mubr.f32.mxu0 0.0
    %215 = vmatmul.mubr.f32.gmra.mrb[0].mxu0 %v109
    %v216 = vpop.f32.mrb[0].mxu0
    %v217 = vadd.f32 %v84, %v216
    %v218 = vpop.f32.mrb[0].mxu0
    %219 = vdwg.mxu0
    %v220 = vmax.f32 %v182, 0.0
    %v221 = vmax.f32 %v187, 0.0
    %v222 = vmax.f32 %v192, 0.0
    %v223 = vmax.f32 %v197, 0.0
    %v224 = vmax.f32 %v202, 0.0
    %v225 = vmax.f32 %v207, 0.0
    %v226 = vmax.f32 %v212, 0.0
    %v227 = vmax.f32 %v217, 0.0
    %v228 = vld [vmem:[%s3] sm:$0xff]
    %v229 = vld [vmem:[%s3 + $0x8] sm:$0xff]
    %v230 = vld [vmem:[%s3 + $0x10] sm:$0xff]
    %v231 = vld [vmem:[%s3 + $0x18] sm:$0xff]
    %v232 = vld [vmem:[%s3 + $0x20] sm:$0xff]
    %v233 = vld [vmem:[%s3 + $0x28] sm:$0xff]
    %v234 = vld [vmem:[%s3 + $0x30] sm:$0xff]
    %v235 = vld [vmem:[%s3 + $0x38] sm:$0xff]
    %v236 = vld [vmem:[%s3 + $0x40] sm:$0xff]
    %v237 = vld [vmem:[%s3 + $0x48] sm:$0xff]
    %v238 = vld [vmem:[%s3 + $0x50] sm:$0xff]
    %v239 = vld [vmem:[%s3 + $0x58] sm:$0xff]
    %v240 = vld [vmem:[%s3 + $0x60] sm:$0xff]
    %v241 = vld [vmem:[%s3 + $0x68] sm:$0xff]
    %v242 = vld [vmem:[%s3 + $0x70] sm:$0xff]
    %v243 = vld [vmem:[%s3 + $0x78] sm:$0xff]
    %v244 = vld [vmem:[%s4] sm:$0xff]
    %v245 = vld [vmem:[%s4 + $0x8] sm:$0xff]
    %v246 = vld [vmem:[%s4 + $0x10] sm:$0xff]
    %v247 = vld [vmem:[%s4 + $0x18] sm:$0xff]
    %v248 = vld [vmem:[%s4 + $0x20] sm:$0xff]
    %v249 = vld [vmem:[%s4 + $0x28] sm:$0xff]
    %v250 = vld [vmem:[%s4 + $0x30] sm:$0xff]
    %v251 = vld [vmem:[%s4 + $0x38] sm:$0xff]
    %v252 = vld [vmem:[%s4 + $0x40] sm:$0xff]
    %v253 = vld [vmem:[%s4 + $0x48] sm:$0xff]
    %v254 = vld [vmem:[%s4 + $0x50] sm:$0xff]
    %v255 = vld [vmem:[%s4 + $0x58] sm:$0xff]
    %v256 = vld [vmem:[%s4 + $0x60] sm:$0xff]
    %v257 = vld [vmem:[%s4 + $0x68] sm:$0xff]
    %v258 = vld [vmem:[%s4 + $0x70] sm:$0xff]
    %v259 = vld [vmem:[%s4 + $0x78] sm:$0xff]
    %261 = vset.pattern.permute.xlu0 0
    %262 = vperm.xlu0 %261, %v244
    %v263 = vpop.permute.xlu0 %262
    %266 = vset.pattern.permute.xlu0 0
    %267 = vperm.xlu0 %266, %v245
    %v268 = vpop.permute.xlu0 %267
    %271 = vset.pattern.permute.xlu0 0
    %272 = vperm.xlu0 %271, %v246
    %v273 = vpop.permute.xlu0 %272
    %276 = vset.pattern.permute.xlu0 0
    %277 = vperm.xlu0 %276, %v247
    %v278 = vpop.permute.xlu0 %277
    %281 = vset.pattern.permute.xlu0 0
    %282 = vperm.xlu0 %281, %v248
    %v283 = vpop.permute.xlu0 %282
    %286 = vset.pattern.permute.xlu0 0
    %287 = vperm.xlu0 %286, %v249
    %v288 = vpop.permute.xlu0 %287
    %291 = vset.pattern.permute.xlu0 0
    %292 = vperm.xlu0 %291, %v250
    %v293 = vpop.permute.xlu0 %292
    %296 = vset.pattern.permute.xlu0 0
    %297 = vperm.xlu0 %296, %v251
    %v298 = vpop.permute.xlu0 %297
    %301 = vset.pattern.permute.xlu0 0
    %302 = vperm.xlu0 %301, %v252
    %v303 = vpop.permute.xlu0 %302
    %306 = vset.pattern.permute.xlu0 0
    %307 = vperm.xlu0 %306, %v253
    %v308 = vpop.permute.xlu0 %307
    %311 = vset.pattern.permute.xlu0 0
    %312 = vperm.xlu0 %311, %v254
    %v313 = vpop.permute.xlu0 %312
    %316 = vset.pattern.permute.xlu0 0
    %317 = vperm.xlu0 %316, %v255
    %v318 = vpop.permute.xlu0 %317
    %321 = vset.pattern.permute.xlu0 0
    %322 = vperm.xlu0 %321, %v256
    %v323 = vpop.permute.xlu0 %322
    %326 = vset.pattern.permute.xlu0 0
    %327 = vperm.xlu0 %326, %v257
    %v328 = vpop.permute.xlu0 %327
    %331 = vset.pattern.permute.xlu0 0
    %332 = vperm.xlu0 %331, %v258
    %v333 = vpop.permute.xlu0 %332
    %336 = vset.pattern.permute.xlu0 0
    %337 = vperm.xlu0 %336, %v259
    %v338 = vpop.permute.xlu0 %337
    %vm340 = vcmask 523264
    %v342 = vsel %vm340, %v228, 0
    %v345 = vsel %vm340, %v229, 0
    %v348 = vsel %vm340, %v230, 0
    %v351 = vsel %vm340, %v231, 0
    %v354 = vsel %vm340, %v232, 0
    %v357 = vsel %vm340, %v233, 0
    %v360 = vsel %vm340, %v234, 0
    %v363 = vsel %vm340, %v235, 0
    %v366 = vsel %vm340, %v236, 0
    %v369 = vsel %vm340, %v237, 0
    %v372 = vsel %vm340, %v238, 0
    %v375 = vsel %vm340, %v239, 0
    %v378 = vsel %vm340, %v240, 0
    %v381 = vsel %vm340, %v241, 0
    %v384 = vsel %vm340, %v242, 0
    %v387 = vsel %vm340, %v243, 0
    %389 = vmatprep.subr.mxu0 0.0
    %390 = vmatpush1.msra.mxu0 %v220
    %391 = vmatprep.subr.mxu0 0.0
    %392 = vmatpush1.msra.mxu0 %v221
    %393 = vmatprep.subr.mxu0 0.0
    %394 = vmatpush1.msra.mxu0 %v222
    %395 = vmatprep.subr.mxu0 0.0
    %396 = vmatpush1.msra.mxu0 %v223
    %397 = vmatprep.subr.mxu0 0.0
    %398 = vmatpush1.msra.mxu0 %v224
    %399 = vmatprep.subr.mxu0 0.0
    %400 = vmatpush1.msra.mxu0 %v225
    %401 = vmatprep.subr.mxu0 0.0
    %402 = vmatpush1.msra.mxu0 %v226
    %403 = vmatprep.subr.mxu0 0.0
    %404 = vmatpush1.msra.mxu0 %v227
    %405 = vmatprep.subr.mxu0 0.0
    %406 = vmatpush1.msra.mxu0 0.0
    %407 = vmatprep.subr.mxu0 0.0
    %408 = vmatpush1.msra.mxu0 0.0
    %409 = vmatprep.subr.mxu0 0.0
    %410 = vmatpush1.msra.mxu0 0.0
    %411 = vmatprep.subr.mxu0 0.0
    %412 = vmatpush1.msra.mxu0 0.0
    %413 = vmatprep.subr.mxu0 0.0
    %414 = vmatpush1.msra.mxu0 0.0
    %415 = vmatprep.subr.mxu0 0.0
    %416 = vmatpush1.msra.mxu0 0.0
    %417 = vmatprep.subr.mxu0 0.0
    %418 = vmatpush1.msra.mxu0 0.0
    %419 = vmatprep.subr.mxu0 0.0
    %420 = vmatpush1.msra.mxu0 0.0
    %421 = vmatprep.subr.mxu0 0.0
    %422 = vmatpush1.msra.mxu0 0.0
    %423 = vmatprep.subr.mxu0 0.0
    %424 = vmatpush1.msra.mxu0 0.0
    %425 = vmatprep.subr.mxu0 0.0
    %426 = vmatpush1.msra.mxu0 0.0
    %427 = vmatprep.subr.mxu0 0.0
    %428 = vmatpush1.msra.mxu0 0.0
    %429 = vmatprep.subr.mxu0 0.0
    %430 = vmatpush1.msra.mxu0 0.0
    %431 = vmatprep.subr.mxu0 0.0
    %432 = vmatpush1.msra.mxu0 0.0
    %433 = vmatprep.subr.mxu0 0.0
    %434 = vmatpush1.msra.mxu0 0.0
    %435 = vmatprep.subr.mxu0 0.0
    %436 = vmatpush1.msra.mxu0 0.0
    %437 = vmatprep.subr.mxu0 0.0
    %438 = vmatpush1.msra.mxu0 0.0
    %439 = vmatprep.subr.mxu0 0.0
    %440 = vmatpush1.msra.mxu0 0.0
    %441 = vmatprep.subr.mxu0 0.0
    %442 = vmatpush1.msra.mxu0 0.0
    %443 = vmatprep.subr.mxu0 0.0
    %444 = vmatpush1.msra.mxu0 0.0
    %445 = vmatprep.subr.mxu0 0.0
    %446 = vmatpush1.msra.mxu0 0.0
    %447 = vmatprep.subr.mxu0 0.0
    %448 = vmatpush1.msra.mxu0 0.0
    %449 = vmatprep.subr.mxu0 0.0
    %450 = vmatpush1.msra.mxu0 0.0
    %451 = vmatprep.subr.mxu0 0.0
    %452 = vmatpush1.msra.mxu0 0.0
    %453 = vmatprep.mubr.f32.mxu0 0.0
    %454 = vmatmul.mubr.f32.gmra.mrb[0].mxu0 %v342
    %v455 = vpop.f32.mrb[0].mxu0
    %v456 = vadd.f32 %v263, %v455
    %v457 = vpop.f32.mrb[0].mxu0
    %458 = vmatprep.mubr.f32.mxu0 0.0
    %459 = vmatmul.mubr.f32.gmra.mrb[0].mxu0 %v345
    %v460 = vpop.f32.mrb[0].mxu0
    %v461 = vadd.f32 %v268, %v460
    %v462 = vpop.f32.mrb[0].mxu0
    %463 = vmatprep.mubr.f32.mxu0 0.0
    %464 = vmatmul.mubr.f32.gmra.mrb[0].mxu0 %v348
    %v465 = vpop.f32.mrb[0].mxu0
    %v466 = vadd.f32 %v273, %v465
    %v467 = vpop.f32.mrb[0].mxu0
    %468 = vmatprep.mubr.f32.mxu0 0.0
    %469 = vmatmul.mubr.f32.gmra.mrb[0].mxu0 %v351
    %v470 = vpop.f32.mrb[0].mxu0
    %v471 = vadd.f32 %v278, %v470
    %v472 = vpop.f32.mrb[0].mxu0
    %473 = vmatprep.mubr.f32.mxu0 0.0
    %474 = vmatmul.mubr.f32.gmra.mrb[0].mxu0 %v354
    %v475 = vpop.f32.mrb[0].mxu0
    %v476 = vadd.f32 %v283, %v475
    %v477 = vpop.f32.mrb[0].mxu0
    %478 = vmatprep.mubr.f32.mxu0 0.0
    %479 = vmatmul.mubr.f32.gmra.mrb[0].mxu0 %v357
    %v480 = vpop.f32.mrb[0].mxu0
    %v481 = vadd.f32 %v288, %v480
    %v482 = vpop.f32.mrb[0].mxu0
    %483 = vmatprep.mubr.f32.mxu0 0.0
    %484 = vmatmul.mubr.f32.gmra.mrb[0].mxu0 %v360
    %v485 = vpop.f32.mrb[0].mxu0
    %v486 = vadd.f32 %v293, %v485
    %v487 = vpop.f32.mrb[0].mxu0
    %488 = vmatprep.mubr.f32.mxu0 0.0
    %489 = vmatmul.mubr.f32.gmra.mrb[0].mxu0 %v363
    %v490 = vpop.f32.mrb[0].mxu0
    %v491 = vadd.f32 %v298, %v490
    %v492 = vpop.f32.mrb[0].mxu0
    %493 = vmatprep.mubr.f32.mxu0 0.0
    %494 = vmatmul.mubr.f32.gmra.mrb[0].mxu0 %v366
    %v495 = vpop.f32.mrb[0].mxu0
    %v496 = vadd.f32 %v303, %v495
    %v497 = vpop.f32.mrb[0].mxu0
    %498 = vmatprep.mubr.f32.mxu0 0.0
    %499 = vmatmul.mubr.f32.gmra.mrb[0].mxu0 %v369
    %v500 = vpop.f32.mrb[0].mxu0
    %v501 = vadd.f32 %v308, %v500
    %v502 = vpop.f32.mrb[0].mxu0
    %503 = vmatprep.mubr.f32.mxu0 0.0
    %504 = vmatmul.mubr.f32.gmra.mrb[0].mxu0 %v372
    %v505 = vpop.f32.mrb[0].mxu0
    %v506 = vadd.f32 %v313, %v505
    %v507 = vpop.f32.mrb[0].mxu0
    %508 = vmatprep.mubr.f32.mxu0 0.0
    %509 = vmatmul.mubr.f32.gmra.mrb[0].mxu0 %v375
    %v510 = vpop.f32.mrb[0].mxu0
    %v511 = vadd.f32 %v318, %v510
    %v512 = vpop.f32.mrb[0].mxu0
    %513 = vmatprep.mubr.f32.mxu0 0.0
    %514 = vmatmul.mubr.f32.gmra.mrb[0].mxu0 %v378
    %v515 = vpop.f32.mrb[0].mxu0
    %v516 = vadd.f32 %v323, %v515
    %v517 = vpop.f32.mrb[0].mxu0
    %518 = vmatprep.mubr.f32.mxu0 0.0
    %519 = vmatmul.mubr.f32.gmra.mrb[0].mxu0 %v381
    %v520 = vpop.f32.mrb[0].mxu0
    %v521 = vadd.f32 %v328, %v520
    %v522 = vpop.f32.mrb[0].mxu0
    %523 = vmatprep.mubr.f32.mxu0 0.0
    %524 = vmatmul.mubr.f32.gmra.mrb[0].mxu0 %v384
    %v525 = vpop.f32.mrb[0].mxu0
    %v526 = vadd.f32 %v333, %v525
    %v527 = vpop.f32.mrb[0].mxu0
    %528 = vmatprep.mubr.f32.mxu0 0.0
    %529 = vmatmul.mubr.f32.gmra.mrb[0].mxu0 %v387
    %v530 = vpop.f32.mrb[0].mxu0
    %v531 = vadd.f32 %v338, %v530
    %v532 = vpop.f32.mrb[0].mxu0
    %533 = vdwg.mxu0
    %v534 = vmax.f32 %v456, 0.0
    %v535 = vmax.f32 %v461, 0.0
    %v536 = vmax.f32 %v466, 0.0
    %v537 = vmax.f32 %v471, 0.0
    %v538 = vmax.f32 %v476, 0.0
    %v539 = vmax.f32 %v481, 0.0
    %v540 = vmax.f32 %v486, 0.0
    %v541 = vmax.f32 %v491, 0.0
    %v542 = vmax.f32 %v496, 0.0
    %v543 = vmax.f32 %v501, 0.0
    %v544 = vmax.f32 %v506, 0.0
    %v545 = vmax.f32 %v511, 0.0
    %v546 = vmax.f32 %v516, 0.0
    %v547 = vmax.f32 %v521, 0.0
    %v548 = vmax.f32 %v526, 0.0
    %v549 = vmax.f32 %v531, 0.0
    %v550 = vld [vmem:[%s5] sm:$0x1]
    %s551 = sld [smem:[#allocation2]]
    %v552 = vstv %s551
    %553 = vmatprep.subr.mxu0 0.0
    %554 = vmatpush1.msra.mxu0 %v534
    %555 = vmatprep.subr.mxu0 0.0
    %556 = vmatpush1.msra.mxu0 %v535
    %557 = vmatprep.subr.mxu0 0.0
    %558 = vmatpush1.msra.mxu0 %v536
    %559 = vmatprep.subr.mxu0 0.0
    %560 = vmatpush1.msra.mxu0 %v537
    %561 = vmatprep.subr.mxu0 0.0
    %562 = vmatpush1.msra.mxu0 %v538
    %563 = vmatprep.subr.mxu0 0.0
    %564 = vmatpush1.msra.mxu0 %v539
    %565 = vmatprep.subr.mxu0 0.0
    %566 = vmatpush1.msra.mxu0 %v540
    %567 = vmatprep.subr.mxu0 0.0
    %568 = vmatpush1.msra.mxu0 %v541
    %569 = vmatprep.subr.mxu0 0.0
    %570 = vmatpush1.msra.mxu0 %v542
    %571 = vmatprep.subr.mxu0 0.0
    %572 = vmatpush1.msra.mxu0 %v543
    %573 = vmatprep.subr.mxu0 0.0
    %574 = vmatpush1.msra.mxu0 %v544
    %575 = vmatprep.subr.mxu0 0.0
    %576 = vmatpush1.msra.mxu0 %v545
    %577 = vmatprep.subr.mxu0 0.0
    %578 = vmatpush1.msra.mxu0 %v546
    %579 = vmatprep.subr.mxu0 0.0
    %580 = vmatpush1.msra.mxu0 %v547
    %581 = vmatprep.subr.mxu0 0.0
    %582 = vmatpush1.msra.mxu0 %v548
    %583 = vmatprep.subr.mxu0 0.0
    %584 = vmatpush1.msra.mxu0 %v549
    %585 = vmatprep.subr.mxu0 0.0
    %586 = vmatpush1.msra.mxu0 0.0
    %587 = vmatprep.subr.mxu0 0.0
    %588 = vmatpush1.msra.mxu0 0.0
    %589 = vmatprep.subr.mxu0 0.0
    %590 = vmatpush1.msra.mxu0 0.0
    %591 = vmatprep.subr.mxu0 0.0
    %592 = vmatpush1.msra.mxu0 0.0
    %593 = vmatprep.subr.mxu0 0.0
    %594 = vmatpush1.msra.mxu0 0.0
    %595 = vmatprep.subr.mxu0 0.0
    %596 = vmatpush1.msra.mxu0 0.0
    %597 = vmatprep.subr.mxu0 0.0
    %598 = vmatpush1.msra.mxu0 0.0
    %599 = vmatprep.subr.mxu0 0.0
    %600 = vmatpush1.msra.mxu0 0.0
    %601 = vmatprep.subr.mxu0 0.0
    %602 = vmatpush1.msra.mxu0 0.0
    %603 = vmatprep.subr.mxu0 0.0
    %604 = vmatpush1.msra.mxu0 0.0
    %605 = vmatprep.subr.mxu0 0.0
    %606 = vmatpush1.msra.mxu0 0.0
    %607 = vmatprep.subr.mxu0 0.0
    %608 = vmatpush1.msra.mxu0 0.0
    %609 = vmatprep.subr.mxu0 0.0
    %610 = vmatpush1.msra.mxu0 0.0
    %611 = vmatprep.subr.mxu0 0.0
    %612 = vmatpush1.msra.mxu0 0.0
    %613 = vmatprep.subr.mxu0 0.0
    %614 = vmatpush1.msra.mxu0 0.0
    %615 = vmatprep.subr.mxu0 0.0
    %616 = vmatpush1.msra.mxu0 0.0
    %617 = vmatprep.mubr.f32.mxu0 0.0
    %618 = vmatmul.mubr.f32.gmra.mrb[0].mxu0 %v550
    %v619 = vpop.f32.mrb[0].mxu0
    %v620 = vadd.f32 %v552, %v619
    %v621 = vpop.f32.mrb[0].mxu0
    %622 = vdwg.mxu0
    %vm623 = vcmask 24576
    %624 = vst.msk [vmem:[#allocation3] sm:$0x1] %vm623, %v620
    // Predicated region
    $region30: #{tpu_custom_call.1} parent=1 // pred_check
      _
    $region31: #{tpu_custom_call.1} parent=1 // pred_check_branch
      %626 = sbr.rel (0) target = $region33
    $region32: #{tpu_custom_call.1} parent=1 // pred_region
      %s628 = ssub.s32 16, 16
      %629 = vsyncadd [#allocation4], %s628
      %s631 = sshll.u32 [#allocation3], 4
      %s632 = int_to_ptr.vmem [resolvable:$true] %s631
      %634 = dma.vmem_to_hbm [thread:$0]  %s632, 16, %s7, [#allocation4]
    $region33: #{tpu_custom_call.1} parent=1 // pred_fallthru
      _
    // Predicated region
    $region34: #{tpu_custom_call.1} parent=1 // pred_check
      _
    $region35: #{tpu_custom_call.1} parent=1 // pred_check_branch
      %636 = sbr.rel (0) target = $region37
    $region36: #{tpu_custom_call.1} parent=1 // pred_region
      %637 = dma.done [#allocation4], 16
    $region37: #{tpu_custom_call.1} parent=1 // pred_fallthru
      _
    %638 = vsyncpa [#allocation4], 1

</llo_original>
